<compile_context>
chip_gen: v5e
topology: v5e:2x2
jax: 0.10.0
libtpu: 0.0.40
codegen_flags: <defaults>
</compile_context>

<pallas_src>
import functools

import jax
import jax.numpy as jnp
from jax.experimental import pallas as pl
from jax.experimental.pallas import tpu as pltpu


# ----------------------------- Pallas kernel --------------------------------
def _rgcn_kernel(h_ref, w_ref, a_ref, b_ref, o_ref, *, num_rels, out_feat):
    """One dst-node tile per grid step; relations fully fused inside the body.

    h_ref : (N_src, in)            bf16   node features (all sources)
    w_ref : (in, R*out)            bf16   lane-dense stacked relation weights
    a_ref : (tile_dst, R*N_src)    f32    flattened normalized adjacency
    b_ref : (1, out)               f32    bias
    o_ref : (tile_dst, out)        f32    output tile
    """
    # (1) lane-dense basis matmul on the MXU (bf16 inputs, f32 accumulation):
    #     hw[s, r*out + o] = (H @ W_r)[s, o]
    hw = jnp.dot(h_ref[...], w_ref[...], preferred_element_type=jnp.float32)

    # (2) restack per-relation slabs along rows: (N_src, R*out) -> (R*N_src, out)
    #     row r*N_src + s  holds  (H @ W_r)[s, :]
    hw_stacked = jnp.concatenate(
        [hw[:, r * out_feat:(r + 1) * out_feat] for r in range(num_rels)],
        axis=0)

    # (3) single deep-K aggregation matmul over (relation, src) jointly.
    #     A_flat[d, r*N_src + s] = A_r[d, s]; contraction K = R*N_src.
    acc = jnp.dot(a_ref[...], hw_stacked, preferred_element_type=jnp.float32)

    # (4) bias + relu, written straight to the output block (no scratch).
    o_ref[...] = jnp.maximum(acc + b_ref[...], 0.0).astype(o_ref.dtype)


def rgcn_layer_pallas(h, weight, adj, bias, *, block_dst=None):
    """h: (N, in) f32, weight: (R, in, out) f32, adj: (R, N, N) f32 normalized
    dense adjacency (A[r, dst, src]), bias: (out,) f32. Returns (N, out) f32."""
    n, in_feat = h.shape
    num_rels, _, out_feat = weight.shape

    # Layout plumbing (one-off, outside the kernel):
    #   W_wide[k, r*out + o] = weight[r, k, o]   -> lane-dense RHS, R*out lanes
    #   A_flat[d, r*n  + s]  = adj[r, d, s]      -> deep-K LHS, K = R*n
    w_wide = jnp.transpose(weight, (1, 0, 2)).reshape(in_feat, num_rels * out_feat)
    a_flat = jnp.transpose(adj, (1, 0, 2)).reshape(n, num_rels * n)
    bias2d = bias.reshape(1, out_feat).astype(jnp.float32)

    # bf16 on the dense-compute operands; adjacency + aggregation stay f32.
    h_bf = h.astype(jnp.bfloat16)
    w_bf = w_wide.astype(jnp.bfloat16)

    # Destination-node tiling (independent tiles -> "parallel"). At toy sizes
    # this is a single tile; at real sizes pick the largest tile that fits VMEM
    # (re-derive for v7x's 64 MiB vs 128 MiB on v5e/v6e).
    if block_dst is None:
        block_dst = n if n <= 512 else 512
    if n % block_dst:
        block_dst = n
    grid = (n // block_dst,)

    # TODO(synk): for large graphs, also tile the (relation, src) contraction
    # axis (innermost "arbitrary" axis accumulating into the resident output
    # block) and/or switch to a CSR / edge-list formulation via scalar prefetch;
    # the dense adjacency wastes bandwidth on sparse graphs.

    kernel = functools.partial(_rgcn_kernel, num_rels=num_rels, out_feat=out_feat)

    return pl.pallas_call(
        kernel,
        out_shape=jax.ShapeDtypeStruct((n, out_feat), jnp.float32),
        grid_spec=pltpu.PrefetchScalarGridSpec(
            num_scalar_prefetch=0,
            grid=grid,
            in_specs=[
                pl.BlockSpec((n, in_feat), lambda i: (0, 0)),                    # H (all src)
                pl.BlockSpec((in_feat, num_rels * out_feat), lambda i: (0, 0)),  # W_wide
                pl.BlockSpec((block_dst, num_rels * n), lambda i: (i, 0)),       # A_flat tile
                pl.BlockSpec((1, out_feat), lambda i: (0, 0)),                   # bias
            ],
            out_specs=pl.BlockSpec((block_dst, out_feat), lambda i: (i, 0)),
        ),
        compiler_params=pltpu.CompilerParams(
            # dst tiles are independent -> shard across v7x's two TensorCores.
            dimension_semantics=("parallel",),
        ),
    )(h_bf, w_bf, a_flat, bias2d)


# ----------------------------- Parameter / graph setup ----------------------
def xavier_uniform(key, shape, gain):
    fan_in, fan_out = shape[-2], shape[-1]
    a = gain * jnp.sqrt(6.0 / (fan_in + fan_out))
    return jax.random.uniform(key, shape, jnp.float32, -a, a)


def compose_basis_weights(w_bases, w_comp, in_feat, num_rels, out_feat):
    """Exactly mirrors the PyTorch view/matmul/view sequence."""
    num_bases = w_bases.shape[0]
    # .view(in_feat, num_bases, out_feat)  -- raw memory reinterpretation
    w = jnp.reshape(w_bases, (in_feat, num_bases, out_feat))
    # torch.matmul(w_comp (R,B), w (I,B,O)) -> (I, R, O)
    w = jnp.einsum("rb,ibo->iro", w_comp, w)
    # .view(num_rels, in_feat, out_feat)   -- raw memory reinterpretation
    return jnp.reshape(w, (num_rels, in_feat, out_feat))


# ----------------------------- Pure-JAX reference (message passing) ---------
def rgcn_reference(h, weight, src, dst, rel, norm, bias, n):
    # message_func: bmm(h[src].unsqueeze(1), weight[rel]).squeeze() * norm
    msg = jnp.einsum("ei,eio->eo", h[src], weight[rel]) * norm[:, None]
    # fn.sum(msg -> h): scatter-add by destination node
    agg = jax.ops.segment_sum(msg, dst, num_segments=n)
    # apply_func: bias + relu
    return jnp.maximum(agg + bias[None, :], 0.0)


# ----------------------------- Main ------------------------------------------
if __name__ == "__main__":
    # Small, TPU-friendly shapes (num_rels * out_feat = 128 -> lane-dense)
    N = 64          # number of nodes
    E = 256         # number of edges
    IN_FEAT = 32
    OUT_FEAT = 32
    NUM_RELS = 4
    NUM_BASES = 2   # < NUM_RELS -> basis decomposition path is exercised
    RELU_GAIN = jnp.sqrt(2.0)

    key = jax.random.PRNGKey(0)
    k_w, k_c, k_b, k_h, k_src, k_dst, k_rel, k_norm = jax.random.split(key, 8)

    # Parameters (deterministic init mirroring __init__ shapes)
    w_bases = xavier_uniform(k_w, (NUM_BASES, IN_FEAT, OUT_FEAT), RELU_GAIN)
    w_comp = xavier_uniform(k_c, (NUM_RELS, NUM_BASES), RELU_GAIN)
    bias = RELU_GAIN * jax.random.normal(k_b, (OUT_FEAT,), jnp.float32)

    # Node features and a random multigraph with relation types + edge norms
    h = jax.random.normal(k_h, (N, IN_FEAT), jnp.float32)
    src = jax.random.randint(k_src, (E,), 0, N)
    dst = jax.random.randint(k_dst, (E,), 0, N)
    rel = jax.random.randint(k_rel, (E,), 0, NUM_RELS)
    norm = jax.random.uniform(k_norm, (E,), jnp.float32, 0.1, 1.0)

    # Basis composition (glue, matches torch view/matmul/view exactly)
    weight = compose_basis_weights(w_bases, w_comp, IN_FEAT, NUM_RELS, OUT_FEAT)

    # Dense normalized adjacency A[r, dst, src] = sum of norm over matching edges
    adj = jnp.zeros((NUM_RELS, N, N), jnp.float32).at[rel, dst, src].add(norm)

    # TODO(synk): is_input_layer=True path (embedding-row gather by
    # rel*in_feat + src_id) is a data-dependent gather, not implemented here.

    out = rgcn_layer_pallas(h, weight, adj, bias)
    out = jax.block_until_ready(out)

    # Reference fed the same bf16-rounded H / W the kernel consumes, so the
    # check isolates kernel correctness from the intended mixed-precision
    # policy; tolerance is sized conservatively for bf16-input matmuls.
    h_q = h.astype(jnp.bfloat16).astype(jnp.float32)
    weight_q = weight.astype(jnp.bfloat16).astype(jnp.float32)
    ref = rgcn_reference(h_q, weight_q, src, dst, rel, norm, bias, N)

    assert out.shape == (N, OUT_FEAT)
    assert jnp.allclose(out, ref, atol=5e-2, rtol=2e-2), (
        float(jnp.max(jnp.abs(out - ref))))

    print("KERNEL_OK")
</pallas_src>

<mosaic_0001>
module attributes {stable_mosaic.version = 11 : i64} {
  func.func @_rgcn_kernel(%arg0: i32, %arg1: memref<64x32xbf16, #tpu.memory_space<vmem>>, %arg2: memref<32x128xbf16, #tpu.memory_space<vmem>>, %arg3: memref<64x256xf32, #tpu.memory_space<vmem>>, %arg4: memref<1x32xf32, #tpu.memory_space<vmem>>, %arg5: memref<64x32xf32, #tpu.memory_space<vmem>>) attributes {dimension_semantics = [#tpu.dimension_semantics<parallel>], iteration_bounds = array<i64: 1>, scalar_prefetch = 0 : i64, scratch_operands = 0 : i64, tpu.core_type = #tpu.core_type<tc>, window_params = [{pipeline_mode = #tpu.pipeline_mode<synchronous>, transform_indices = @transform_0, window_bounds = array<i64: 64, 32>}, {pipeline_mode = #tpu.pipeline_mode<synchronous>, transform_indices = @transform_1, window_bounds = array<i64: 32, 128>}, {transform_indices = @transform_2, window_bounds = array<i64: 64, 256>}, {pipeline_mode = #tpu.pipeline_mode<synchronous>, transform_indices = @transform_3, window_bounds = array<i64: 1, 32>}, {transform_indices = @transform_4, window_bounds = array<i64: 64, 32>}]} {
    %c0 = arith.constant 0 : index
    %c0_0 = arith.constant 0 : index
    %0 = vector.load %arg1[%c0, %c0_0] : memref<64x32xbf16, #tpu.memory_space<vmem>>, vector<64x32xbf16>
    %c0_1 = arith.constant 0 : index
    %c0_2 = arith.constant 0 : index
    %1 = vector.load %arg2[%c0_1, %c0_2] : memref<32x128xbf16, #tpu.memory_space<vmem>>, vector<32x128xbf16>
    %cst = arith.constant dense<0.000000e+00> : vector<64x128xf32>
    %2 = tpu.matmul %0, %1, %cst {dimension_numbers = #tpu.dot_dimension_numbers<[1], [0], [0], [1], [0, 0, 1, 1], [], []>} : vector<64x32xbf16>, vector<32x128xbf16>, vector<64x128xf32> -> vector<64x128xf32>
    %3 = vector.extract_strided_slice %2 {offsets = [0, 0], sizes = [64, 32], strides = [1, 1]} : vector<64x128xf32> to vector<64x32xf32>
    %4 = vector.extract_strided_slice %2 {offsets = [0, 32], sizes = [64, 32], strides = [1, 1]} : vector<64x128xf32> to vector<64x32xf32>
    %5 = vector.extract_strided_slice %2 {offsets = [0, 64], sizes = [64, 32], strides = [1, 1]} : vector<64x128xf32> to vector<64x32xf32>
    %6 = vector.extract_strided_slice %2 {offsets = [0, 96], sizes = [64, 32], strides = [1, 1]} : vector<64x128xf32> to vector<64x32xf32>
    %7 = tpu.concatenate %3, %4, %5, %6 in 0 : vector<64x32xf32>, vector<64x32xf32>, vector<64x32xf32>, vector<64x32xf32> -> vector<256x32xf32>
    %c0_3 = arith.constant 0 : index
    %c0_4 = arith.constant 0 : index
    %8 = vector.load %arg3[%c0_3, %c0_4] : memref<64x256xf32, #tpu.memory_space<vmem>>, vector<64x256xf32>
    %cst_5 = arith.constant dense<0.000000e+00> : vector<64x32xf32>
    %9 = tpu.matmul %8, %7, %cst_5 {dimension_numbers = #tpu.dot_dimension_numbers<[1], [0], [0], [1], [0, 0, 1, 1], [], []>} : vector<64x256xf32>, vector<256x32xf32>, vector<64x32xf32> -> vector<64x32xf32>
    %c0_6 = arith.constant 0 : index
    %c0_7 = arith.constant 0 : index
    %10 = vector.load %arg4[%c0_6, %c0_7] : memref<1x32xf32, #tpu.memory_space<vmem>>, vector<1x32xf32>
    %11 = vector.broadcast %10 : vector<1x32xf32> to vector<64x32xf32>
    %12 = arith.addf %9, %11 : vector<64x32xf32>
    %cst_8 = arith.constant 0.000000e+00 : f32
    %13 = vector.broadcast %cst_8 : f32 to vector<64x32xf32>
    %14 = arith.maximumf %12, %13 : vector<64x32xf32>
    %c0_9 = arith.constant 0 : index
    %c0_10 = arith.constant 0 : index
    %15 = vector.load %arg5[%c0_9, %c0_10] : memref<64x32xf32, #tpu.memory_space<vmem>>, vector<64x32xf32>
    tpu.vector_store %arg5[%c0_9, %c0_10], %14 {strides = array<i32>} : memref<64x32xf32, #tpu.memory_space<vmem>>, vector<64x32xf32>,
    return
  }
  func.func @transform_0(%arg0: i32) -> (i32, i32) {
    %c0_i32 = arith.constant 0 : i32
    %c0_i32_0 = arith.constant 0 : i32
    %c0_i32_1 = arith.constant 0 : i32
    return %c0_i32, %c0_i32_0 : i32, i32
  }
  func.func @transform_1(%arg0: i32) -> (i32, i32) {
    %c0_i32 = arith.constant 0 : i32
    %c0_i32_0 = arith.constant 0 : i32
    %c0_i32_1 = arith.constant 0 : i32
    return %c0_i32, %c0_i32_0 : i32, i32
  }
  func.func @transform_2(%arg0: i32) -> (i32, i32) {
    %c0_i32 = arith.constant 0 : i32
    %c0_i32_0 = arith.constant 0 : i32
    return %arg0, %c0_i32 : i32, i32
  }
  func.func @transform_3(%arg0: i32) -> (i32, i32) {
    %c0_i32 = arith.constant 0 : i32
    %c0_i32_0 = arith.constant 0 : i32
    %c0_i32_1 = arith.constant 0 : i32
    return %c0_i32, %c0_i32_0 : i32, i32
  }
  func.func @transform_4(%arg0: i32) -> (i32, i32) {
    %c0_i32 = arith.constant 0 : i32
    %c0_i32_0 = arith.constant 0 : i32
    return %arg0, %c0_i32 : i32, i32
  }
}

</mosaic_0001>

<llo_original>
// kernel: tpu_custom_call.1
$region0: #{tpu_custom_call.1}
  #allocation0 [shape = 'u32[]', space=smem, size = 0x4, offset = 0x4, fixed_abs, tag = 'smem constant byte address 0x4 - core index']
  #allocation1 [shape = 'u32[72,128]{1,0:T(1,128)}', space=vmem, size = 0x9000, scoped, tag = 'internal scratch']
  %s0 = inlined_call_operand.vmem [shape: bf16[64,32], index: 0, kind: input, shape index: {}]
  %s1 = inlined_call_operand.vmem [shape: bf16[32,128], index: 1, kind: input, shape index: {}]
  %s2 = inlined_call_operand.hbm [shape: f32[64,256], index: 2, kind: input, shape index: {}]
  %s3 = inlined_call_operand.vmem [shape: f32[1,32], index: 3, kind: input, shape index: {}]
  %s4 = inlined_call_operand.vmem [shape: f32[64,32], index: 4, kind: output, shape index: {}]
  %s5 = sld [smem:[#allocation0]]
  $region30: #{tpu_custom_call.1} parent=0
    _
  %s7 = ssub.s32 1, %s5
  %s8 = scalar_select 0, %s7, %s5
  $region1: #{tpu_custom_call.1} parent=0
    #allocation2 [shape = 'u8[65536]{0}', space=vmem, size = 0x10000, scoped, tag = 'input window, operand 2, single buffered']
    #allocation3 [shape = 's32[1]{0}', space=sflag, size = 0x4, scoped, tag = 'scoped memory for tpu_custom_call.1']
    %9 = vsyncpa [#allocation3], 0
    // Predicated region
    $region2: #{tpu_custom_call.1} parent=1 // pred_check
      _
    $region3: #{tpu_custom_call.1} parent=1 // pred_check_branch
      %11 = sbr.rel (0) target = $region5
    $region4: #{tpu_custom_call.1} parent=1 // pred_region
      _
    $region5: #{tpu_custom_call.1} parent=1 // pred_fallthru
      _
    // Predicated region
    $region6: #{tpu_custom_call.1} parent=1 // pred_check
      _
    $region7: #{tpu_custom_call.1} parent=1 // pred_check_branch
      %13 = sbr.rel (0) target = $region9
    $region8: #{tpu_custom_call.1} parent=1 // pred_region
      _
    $region9: #{tpu_custom_call.1} parent=1 // pred_fallthru
      _
    // Predicated region
    $region10: #{tpu_custom_call.1} parent=1 // pred_check
      _
    $region11: #{tpu_custom_call.1} parent=1 // pred_check_branch
      %15 = sbr.rel (0) target = $region13
    $region12: #{tpu_custom_call.1} parent=1 // pred_region
      %17 = vsyncadd [#allocation3], 0
      %s18 = sshll.u32 %s2, 4
      %s19 = int_to_ptr.hbm [resolvable:$true] %s18
      %s20 = sshll.u32 [#allocation2], 4
      %s21 = int_to_ptr.vmem [resolvable:$true] %s20
      %26 = dma.hbm_to_vmem [thread:$0]  %s19, 2048, %s21, [#allocation3], 256, 256, 16
    $region13: #{tpu_custom_call.1} parent=1 // pred_fallthru
      _
    // Predicated region
    $region14: #{tpu_custom_call.1} parent=1 // pred_check
      _
    $region15: #{tpu_custom_call.1} parent=1 // pred_check_branch
      %28 = sbr.rel (0) target = $region17
    $region16: #{tpu_custom_call.1} parent=1 // pred_region
      _
    $region17: #{tpu_custom_call.1} parent=1 // pred_fallthru
      _
    // Predicated region
    $region18: #{tpu_custom_call.1} parent=1 // pred_check
      _
    $region19: #{tpu_custom_call.1} parent=1 // pred_check_branch
      %30 = sbr.rel (0) target = $region21
    $region20: #{tpu_custom_call.1} parent=1 // pred_region
      %32 = dma.done [#allocation3], 2048
    $region21: #{tpu_custom_call.1} parent=1 // pred_fallthru
      _
    %v34 = vld [vmem:[%s0] sm:$0xf]
    %v35 = vld [vmem:[%s0 + $0x4] sm:$0xf]
    %v36 = vld [vmem:[%s0 + $0x8] sm:$0xf]
    %v37 = vld [vmem:[%s0 + $0xc] sm:$0xf]
    %v38 = vld [vmem:[%s0 + $0x10] sm:$0xf]
    %v39 = vld [vmem:[%s0 + $0x14] sm:$0xf]
    %v40 = vld [vmem:[%s0 + $0x18] sm:$0xf]
    %v41 = vld [vmem:[%s0 + $0x1c] sm:$0xf]
    %v42 = vld [vmem:[%s1] sm:$0xf]
    %v43 = vld [vmem:[%s1 + $0x4] sm:$0xf]
    %v44 = vld [vmem:[%s1 + $0x8] sm:$0xf]
    %v45 = vld [vmem:[%s1 + $0xc] sm:$0xf]
    %v54 = vunpack.c.l.b16 %v34
    %v55 = vunpack.c.l.b16 %v35
    %v56 = vunpack.c.l.b16 %v36
    %v57 = vunpack.c.l.b16 %v37
    %v58 = vunpack.c.l.b16 %v38
    %v59 = vunpack.c.l.b16 %v39
    %v60 = vunpack.c.l.b16 %v40
    %v61 = vunpack.c.l.b16 %v41
    %v62 = vpack.c.b16 %v55, %v54
    %v63 = vpack.c.b16 %v57, %v56
    %v64 = vpack.c.b16 %v59, %v58
    %v65 = vpack.c.b16 %v61, %v60
    %v70 = vunpack.c.l.b16 %v42
    %v71 = vunpack.c.l.b16 %v43
    %v72 = vunpack.c.l.b16 %v44
    %v73 = vunpack.c.l.b16 %v45
    %v74 = vpack.c.b16 %v71, %v70
    %v75 = vpack.c.b16 %v73, %v72
    %vm78 = vcmask 261120
    %v80 = vsel %vm78, %v62, 0
    %v83 = vsel %vm78, %v63, 0
    %v86 = vsel %vm78, %v64, 0
    %v89 = vsel %vm78, %v65, 0
    %91 = vmatpush.bf16.msra.mxu0 0
    %92 = vmatpush.bf16.msra.mxu0 0
    %93 = vmatpush.bf16.msra.mxu0 0
    %94 = vmatpush.bf16.msra.mxu0 0
    %95 = vmatpush.bf16.msra.mxu0 0
    %96 = vmatpush.bf16.msra.mxu0 0
    %97 = vmatpush.bf16.msra.mxu0 %v75
    %98 = vmatpush.bf16.msra.mxu0 %v74
    %99 = vmatmul.bf16.gmra.mxu0 %v80
    %v100 = vpop.f32.mrf.mxu0
    %v101 = vadd.f32 0.0, %v100
    %v102 = vpop.f32.mrf.mxu0
    %v103 = vadd.f32 0.0, %v102
    %104 = vmatmul.bf16.gmra.mxu0 %v83
    %v105 = vpop.f32.mrf.mxu0
    %v106 = vadd.f32 0.0, %v105
    %v107 = vpop.f32.mrf.mxu0
    %v108 = vadd.f32 0.0, %v107
    %109 = vmatmul.bf16.gmra.mxu0 %v86
    %v110 = vpop.f32.mrf.mxu0
    %v111 = vadd.f32 0.0, %v110
    %v112 = vpop.f32.mrf.mxu0
    %v113 = vadd.f32 0.0, %v112
    %114 = vmatmul.bf16.gmra.mxu0 %v89
    %v115 = vpop.f32.mrf.mxu0
    %v116 = vadd.f32 0.0, %v115
    %v117 = vpop.f32.mrf.mxu0
    %v118 = vadd.f32 0.0, %v117
    %119 = vdwg.mxu0
    %128 = vrot.lane.b32.xlu0 %v101, 96
    %v129 = vpop.permute.xlu0 %128
    %130 = vrot.lane.b32.xlu0 %v103, 96
    %v131 = vpop.permute.xlu0 %130
    %132 = vrot.lane.b32.xlu0 %v106, 96
    %v133 = vpop.permute.xlu0 %132
    %134 = vrot.lane.b32.xlu0 %v108, 96
    %v135 = vpop.permute.xlu0 %134
    %136 = vrot.lane.b32.xlu0 %v111, 96
    %v137 = vpop.permute.xlu0 %136
    %138 = vrot.lane.b32.xlu0 %v113, 96
    %v139 = vpop.permute.xlu0 %138
    %140 = vrot.lane.b32.xlu0 %v116, 96
    %v141 = vpop.permute.xlu0 %140
    %142 = vrot.lane.b32.xlu0 %v118, 96
    %v143 = vpop.permute.xlu0 %142
    %152 = vrot.lane.b32.xlu0 %v101, 64
    %v153 = vpop.permute.xlu0 %152
    %154 = vrot.lane.b32.xlu0 %v103, 64
    %v155 = vpop.permute.xlu0 %154
    %156 = vrot.lane.b32.xlu0 %v106, 64
    %v157 = vpop.permute.xlu0 %156
    %158 = vrot.lane.b32.xlu0 %v108, 64
    %v159 = vpop.permute.xlu0 %158
    %160 = vrot.lane.b32.xlu0 %v111, 64
    %v161 = vpop.permute.xlu0 %160
    %162 = vrot.lane.b32.xlu0 %v113, 64
    %v163 = vpop.permute.xlu0 %162
    %164 = vrot.lane.b32.xlu0 %v116, 64
    %v165 = vpop.permute.xlu0 %164
    %166 = vrot.lane.b32.xlu0 %v118, 64
    %v167 = vpop.permute.xlu0 %166
    %176 = vrot.lane.b32.xlu0 %v101, 32
    %v177 = vpop.permute.xlu0 %176
    %178 = vrot.lane.b32.xlu0 %v103, 32
    %v179 = vpop.permute.xlu0 %178
    %180 = vrot.lane.b32.xlu0 %v106, 32
    %v181 = vpop.permute.xlu0 %180
    %182 = vrot.lane.b32.xlu0 %v108, 32
    %v183 = vpop.permute.xlu0 %182
    %184 = vrot.lane.b32.xlu0 %v111, 32
    %v185 = vpop.permute.xlu0 %184
    %186 = vrot.lane.b32.xlu0 %v113, 32
    %v187 = vpop.permute.xlu0 %186
    %188 = vrot.lane.b32.xlu0 %v116, 32
    %v189 = vpop.permute.xlu0 %188
    %190 = vrot.lane.b32.xlu0 %v118, 32
    %v191 = vpop.permute.xlu0 %190
    %v200 = vld [vmem:[#allocation2] sm:$0xff]
    %v201 = vld [vmem:[#allocation2 + $0x8] sm:$0xff]
    %v202 = vld [vmem:[#allocation2 + $0x10] sm:$0xff]
    %v203 = vld [vmem:[#allocation2 + $0x18] sm:$0xff]
    %v204 = vld [vmem:[#allocation2 + $0x20] sm:$0xff]
    %v205 = vld [vmem:[#allocation2 + $0x28] sm:$0xff]
    %v206 = vld [vmem:[#allocation2 + $0x30] sm:$0xff]
    %v207 = vld [vmem:[#allocation2 + $0x38] sm:$0xff]
    %v208 = vld [vmem:[#allocation2 + $0x40] sm:$0xff]
    %v209 = vld [vmem:[#allocation2 + $0x48] sm:$0xff]
    %v210 = vld [vmem:[#allocation2 + $0x50] sm:$0xff]
    %v211 = vld [vmem:[#allocation2 + $0x58] sm:$0xff]
    %v212 = vld [vmem:[#allocation2 + $0x60] sm:$0xff]
    %v213 = vld [vmem:[#allocation2 + $0x68] sm:$0xff]
    %v214 = vld [vmem:[#allocation2 + $0x70] sm:$0xff]
    %v215 = vld [vmem:[#allocation2 + $0x78] sm:$0xff]
    %v216 = vld [vmem:[%s3] sm:$0x1]
    %v218 = vperm.slane %v216, 0
    %220 = vmatpush.msra.mxu0 %v143
    %221 = vmatpush.msra.mxu0 %v141
    %222 = vmatpush.msra.mxu0 %v139
    %223 = vmatpush.msra.mxu0 %v137
    %224 = vmatpush.msra.mxu0 %v135
    %225 = vmatpush.msra.mxu0 %v133
    %226 = vmatpush.msra.mxu0 %v131
    %227 = vmatpush.msra.mxu0 %v129
    %228 = vmatpush.msra.mxu0 %v118
    %229 = vmatpush.msra.mxu0 %v116
    %230 = vmatpush.msra.mxu0 %v113
    %231 = vmatpush.msra.mxu0 %v111
    %232 = vmatpush.msra.mxu0 %v108
    %233 = vmatpush.msra.mxu0 %v106
    %234 = vmatpush.msra.mxu0 %v103
    %235 = vmatpush.msra.mxu0 %v101
    %236 = vmatmul.f32.gmra.mxu0 %v200
    %v237 = vpop.f32.mrf.mxu0
    %v238 = vadd.f32 %v218, %v237
    %239 = vmatmul.f32.gmra.mxu0 %v202
    %v240 = vpop.f32.mrf.mxu0
    %v241 = vadd.f32 %v218, %v240
    %242 = vmatmul.f32.gmra.mxu0 %v204
    %v243 = vpop.f32.mrf.mxu0
    %v244 = vadd.f32 %v218, %v243
    %245 = vmatmul.f32.gmra.mxu0 %v206
    %v246 = vpop.f32.mrf.mxu0
    %v247 = vadd.f32 %v218, %v246
    %248 = vmatmul.f32.gmra.mxu0 %v208
    %v249 = vpop.f32.mrf.mxu0
    %v250 = vadd.f32 %v218, %v249
    %251 = vmatmul.f32.gmra.mxu0 %v210
    %v252 = vpop.f32.mrf.mxu0
    %v253 = vadd.f32 %v218, %v252
    %254 = vmatmul.f32.gmra.mxu0 %v212
    %v255 = vpop.f32.mrf.mxu0
    %v256 = vadd.f32 %v218, %v255
    %257 = vmatmul.f32.gmra.mxu0 %v214
    %v258 = vpop.f32.mrf.mxu0
    %v259 = vadd.f32 %v218, %v258
    %260 = vdwg.mxu0
    %261 = vmatpush.msra.mxu0 %v191
    %262 = vmatpush.msra.mxu0 %v189
    %263 = vmatpush.msra.mxu0 %v187
    %264 = vmatpush.msra.mxu0 %v185
    %265 = vmatpush.msra.mxu0 %v183
    %266 = vmatpush.msra.mxu0 %v181
    %267 = vmatpush.msra.mxu0 %v179
    %268 = vmatpush.msra.mxu0 %v177
    %269 = vmatpush.msra.mxu0 %v167
    %270 = vmatpush.msra.mxu0 %v165
    %271 = vmatpush.msra.mxu0 %v163
    %272 = vmatpush.msra.mxu0 %v161
    %273 = vmatpush.msra.mxu0 %v159
    %274 = vmatpush.msra.mxu0 %v157
    %275 = vmatpush.msra.mxu0 %v155
    %276 = vmatpush.msra.mxu0 %v153
    %277 = vmatmul.f32.gmra.mxu0 %v201
    %v278 = vpop.f32.mrf.mxu0
    %v279 = vadd.f32 %v238, %v278
    %280 = vmatmul.f32.gmra.mxu0 %v203
    %v281 = vpop.f32.mrf.mxu0
    %v282 = vadd.f32 %v241, %v281
    %283 = vmatmul.f32.gmra.mxu0 %v205
    %v284 = vpop.f32.mrf.mxu0
    %v285 = vadd.f32 %v244, %v284
    %286 = vmatmul.f32.gmra.mxu0 %v207
    %v287 = vpop.f32.mrf.mxu0
    %v288 = vadd.f32 %v247, %v287
    %289 = vmatmul.f32.gmra.mxu0 %v209
    %v290 = vpop.f32.mrf.mxu0
    %v291 = vadd.f32 %v250, %v290
    %292 = vmatmul.f32.gmra.mxu0 %v211
    %v293 = vpop.f32.mrf.mxu0
    %v294 = vadd.f32 %v253, %v293
    %295 = vmatmul.f32.gmra.mxu0 %v213
    %v296 = vpop.f32.mrf.mxu0
    %v297 = vadd.f32 %v256, %v296
    %298 = vmatmul.f32.gmra.mxu0 %v215
    %v299 = vpop.f32.mrf.mxu0
    %v300 = vadd.f32 %v259, %v299
    %301 = vdwg.mxu0
    %v302 = vmax.f32 %v279, 0.0
    %v303 = vmax.f32 %v282, 0.0
    %v304 = vmax.f32 %v285, 0.0
    %v305 = vmax.f32 %v288, 0.0
    %v306 = vmax.f32 %v291, 0.0
    %v307 = vmax.f32 %v294, 0.0
    %v308 = vmax.f32 %v297, 0.0
    %v309 = vmax.f32 %v300, 0.0
    %310 = vst.msk [vmem:[%s4] sm:$0xff] %vm78, %v302
    %311 = vst.msk [vmem:[%s4 + $0x8] sm:$0xff] %vm78, %v303
    %312 = vst.msk [vmem:[%s4 + $0x10] sm:$0xff] %vm78, %v304
    %313 = vst.msk [vmem:[%s4 + $0x18] sm:$0xff] %vm78, %v305
    %314 = vst.msk [vmem:[%s4 + $0x20] sm:$0xff] %vm78, %v306
    %315 = vst.msk [vmem:[%s4 + $0x28] sm:$0xff] %vm78, %v307
    %316 = vst.msk [vmem:[%s4 + $0x30] sm:$0xff] %vm78, %v308
    %317 = vst.msk [vmem:[%s4 + $0x38] sm:$0xff] %vm78, %v309
    // Predicated region
    $region22: #{tpu_custom_call.1} parent=1 // pred_check
      _
    $region23: #{tpu_custom_call.1} parent=1 // pred_check_branch
      %319 = sbr.rel (0) target = $region25
    $region24: #{tpu_custom_call.1} parent=1 // pred_region
      _
    $region25: #{tpu_custom_call.1} parent=1 // pred_fallthru
      _
    // Predicated region
    $region26: #{tpu_custom_call.1} parent=1 // pred_check
      _
    $region27: #{tpu_custom_call.1} parent=1 // pred_check_branch
      %321 = sbr.rel (0) target = $region29
    $region28: #{tpu_custom_call.1} parent=1 // pred_region
      _
    $region29: #{tpu_custom_call.1} parent=1 // pred_fallthru
      _
    %322 = vsyncpa [#allocation3], 1

</llo_original>
